<compile_context>
chip_gen: v7x
topology: tpu7x:2x2x1
jax: 0.10.0
libtpu: 0.0.40
codegen_flags: <defaults>
</compile_context>

<pallas_src>
import functools
import math

import jax
import jax.numpy as jnp
import numpy as np
from jax.experimental import pallas as pl
from jax.experimental.pallas import tpu as pltpu


def _round_up(x, m):
    return (x + m - 1) // m * m


def timestep_embedder_kernel(t_ref, tab_ref, w1_ref, b1_ref, w2_ref, b2_ref,
                             out_ref):
    """One grid point = one column block of the second linear / output.

    t_ref:   (Np, 1)  f32   padded timesteps
    tab_ref: (2, D)   f32   row 0 = duplicated freqs, row 1 = phase
    w1_ref:  (D, Hp)  param dtype (replicated across grid points)
    b1_ref:  (1, Hp)  param dtype (replicated)
    w2_ref:  (Hp, Hc) param dtype (column block)
    b2_ref:  (1, Hc)  param dtype (column block)
    out_ref: (Np, Hc)
    """
    t = t_ref[...]
    tab = tab_ref[...]
    # cos(x) == sin(x + pi/2): one fused sin table replaces the lane-dim
    # concat([cos, sin]).  Keep the range reduction in f32.
    args = t * tab[0:1, :] + tab[1:2, :]
    emb = jnp.sin(args).astype(w1_ref.dtype)           # == t_freq.to(dtype)

    # Linear 1 (MXU) + SiLU; accumulate / activate in f32.
    h = jnp.dot(emb, w1_ref[...], preferred_element_type=jnp.float32)
    h = h + b1_ref[...].astype(jnp.float32)
    h = h * jax.nn.sigmoid(h)                           # SiLU in f32
    h = h.astype(w2_ref.dtype)

    # Linear 2 (MXU), this grid point's column block only.
    o = jnp.dot(h, w2_ref[...], preferred_element_type=jnp.float32)
    o = o + b2_ref[...].astype(jnp.float32)
    out_ref[...] = o.astype(out_ref.dtype)


@functools.lru_cache(maxsize=None)
def _sinusoid_table(dim, max_period):
    """(2, dim) f32 table so that emb = sin(t * table[0] + table[1]).

    Columns [0, half) carry phase pi/2 (== cos), columns [half, 2*half) carry
    phase 0 (== sin); an odd trailing column gets freq = phase = 0 -> sin(0)=0,
    matching the PyTorch zero-pad.  NOTE: lru_cache pins one tiny device array
    per (dim, max_period) config for process lifetime (intentional).
    """
    half = dim // 2
    f = np.exp(-math.log(max_period) * np.arange(half, dtype=np.float32) / half)
    freqs = np.zeros((dim,), np.float32)
    phase = np.zeros((dim,), np.float32)
    freqs[:half] = f
    freqs[half:2 * half] = f
    phase[:half] = math.pi / 2.0
    return jnp.asarray(np.stack([freqs, phase]))


def _default_column_blocks():
    """2 on v7x (2 TensorCores/chip, each with its own HBM DMA path) so the
    dominant w2 DMA is split across cores via a "parallel" grid axis; 1 on
    single-TC chips (v5e / v6e)."""
    try:
        kind = jax.devices()[0].device_kind.lower()
    except Exception:
        return 1
    return 2 if "v7" in kind else 1


def prepare_params(params, dtype, hidden_size):
    """One-time prep OUTSIDE the hot path: cast params to `dtype` and zero-pad
    the hidden dim up to a multiple of 128 (lane-dense weights/output).

    Padding correctness relies on:
      * padded b1 columns being ZERO and SiLU(0) == 0, so padded h columns are
        exactly zero, and
      * padded w2 rows/columns and b2 columns being ZERO, so padded columns
        never leak into the valid output columns.
    Keep the pads zero if the activation or layout ever changes.
    """
    w1, b1, w2, b2 = params
    D, H = w1.shape
    assert H == hidden_size and w2.shape == (H, H)
    assert b1.shape == (H,) and b2.shape == (H,)
    Hp = _round_up(H, 128)
    w1p = jnp.zeros((D, Hp), dtype).at[:, :H].set(w1.astype(dtype))
    b1p = jnp.zeros((1, Hp), dtype).at[0, :H].set(b1.astype(dtype))
    w2p = jnp.zeros((Hp, Hp), dtype).at[:H, :H].set(w2.astype(dtype))
    b2p = jnp.zeros((1, Hp), dtype).at[0, :H].set(b2.astype(dtype))
    return (w1p, b1p, w2p, b2p)


def timestep_embedder(t, prepared_params, hidden_size,
                      frequency_embedding_size=256, max_period=10000,
                      column_blocks=None):
    """t: (N,) float timesteps.  prepared_params: output of prepare_params().
    Returns (N, hidden_size) in the prepared param dtype (module's mlp dtype)."""
    w1, b1, w2, b2 = prepared_params
    N = t.shape[0]
    D = w1.shape[0]
    Hp = w2.shape[1]
    out_dtype = w2.dtype
    itemsize = jnp.dtype(out_dtype).itemsize

    # Amortize the weight DMA: pad rows to a multiple of 16 (full packed bf16
    # sublane group -> unmasked stores; extra rows are free, DMA-bound kernel).
    Np = _round_up(N, 16)
    t_pad = jnp.zeros((Np,), jnp.float32).at[:N].set(t.astype(jnp.float32))
    t2d = t_pad.reshape(Np, 1)

    tab = _sinusoid_table(frequency_embedding_size, max_period)

    # Column grid over w2/b2/out: 2 blocks on v7x so each TensorCore DMAs only
    # half of w2 (the dominant weight term); 1 block elsewhere.
    nb = _default_column_blocks() if column_blocks is None else int(column_blocks)
    if nb < 1 or Hp % (128 * nb) != 0:
        nb = 1
    Hc = Hp // nb

    # DMA-dominated cost hint for the XLA scheduler.
    weight_bytes = (w1.size + b1.size + w2.size + b2.size) * itemsize
    cost = pl.CostEstimate(
        flops=int(2 * Np * D * Hp + 2 * Np * Hp * Hp),
        transcendentals=int(Np * D + Np * Hp),
        bytes_accessed=int(weight_bytes + Np * 4 + tab.size * 4
                           + Np * Hp * itemsize),
    )

    # Scoped-VMEM budget: one set of blocks, double-buffered by the pipeline,
    # plus headroom for f32 intermediates / compiler scratch.  (v5e's default
    # is only 16 MiB -> f32 weights at hidden >= 2048 would trip it otherwise;
    # cap at 64 MiB to stay within v7x physical VMEM.)
    block_bytes = (Np * 4 + tab.size * 4
                   + (D + 1) * Hp * itemsize       # w1 + b1 (replicated)
                   + (Hp + 1) * Hc * itemsize      # w2 + b2 column block
                   + Np * Hc * itemsize)           # out column block
    vmem_limit = int(min(max(2 * block_bytes + (4 << 20), 8 << 20), 64 << 20))

    out = pl.pallas_call(
        timestep_embedder_kernel,
        out_shape=jax.ShapeDtypeStruct((Np, Hp), out_dtype),
        grid=(nb,),
        in_specs=[
            pl.BlockSpec((Np, 1), lambda j: (0, 0)),     # t (replicated)
            pl.BlockSpec((2, D), lambda j: (0, 0)),      # sinusoid table
            pl.BlockSpec((D, Hp), lambda j: (0, 0)),     # w1 (replicated)
            pl.BlockSpec((1, Hp), lambda j: (0, 0)),     # b1 (replicated)
            pl.BlockSpec((Hp, Hc), lambda j: (0, j)),    # w2 column block
            pl.BlockSpec((1, Hc), lambda j: (0, j)),     # b2 column block
        ],
        out_specs=pl.BlockSpec((Np, Hc), lambda j: (0, j)),
        compiler_params=pltpu.CompilerParams(
            dimension_semantics=("parallel",),
            vmem_limit_bytes=vmem_limit,
        ),
        cost_estimate=cost,
    )(t2d, tab, w1, b1, w2, b2)

    if Np != N:
        out = out[:N]
    if Hp != hidden_size:
        # NOTE: lane-sparse copy; for non-multiple-of-128 hidden sizes prefer
        # consuming the padded (N, Hp) output downstream (fuse the slice into
        # the consumer).  Kept to honor the module's (N, hidden_size) contract.
        # OpenSora's 1152 is already a multiple of 128, so this path is free.
        out = out[:, :hidden_size]
    return out


def init_params(key, hidden_size, frequency_embedding_size=256):
    k1, k2, k3, k4 = jax.random.split(key, 4)
    # Stored as (in, out): PyTorch Linear weight (out, in), transposed.
    w1 = jax.random.normal(k1, (frequency_embedding_size, hidden_size),
                           jnp.float32) * 0.02
    b1 = jax.random.normal(k2, (hidden_size,), jnp.float32) * 0.02
    w2 = jax.random.normal(k3, (hidden_size, hidden_size), jnp.float32) * 0.02
    b2 = jax.random.normal(k4, (hidden_size,), jnp.float32) * 0.02
    return w1, b1, w2, b2


def reference(t, params, dtype, frequency_embedding_size=256, max_period=10000):
    """Pure-JAX reference mirroring the PyTorch forward (cos/sin concat, dtype
    cast, then the MLP entirely in `dtype`)."""
    w1, b1, w2, b2 = params
    half = frequency_embedding_size // 2
    freqs = jnp.exp(-math.log(max_period)
                    * jnp.arange(half, dtype=jnp.float32) / half)
    args = t.astype(jnp.float32)[:, None] * freqs[None]
    emb = jnp.concatenate([jnp.cos(args), jnp.sin(args)], axis=-1)
    if frequency_embedding_size % 2:
        emb = jnp.concatenate([emb, jnp.zeros_like(emb[:, :1])], axis=-1)
    emb = emb.astype(dtype)
    h = jnp.dot(emb, w1.astype(dtype),
                precision=jax.lax.Precision.HIGHEST) + b1.astype(dtype)
    h = h * jax.nn.sigmoid(h)
    return jnp.dot(h, w2.astype(dtype),
                   precision=jax.lax.Precision.HIGHEST) + b2.astype(dtype)


def _max_rel_err(a, b):
    a = jnp.asarray(a, jnp.float32)
    b = jnp.asarray(b, jnp.float32)
    return float(jnp.max(jnp.abs(a - b)) / (jnp.max(jnp.abs(b)) + 1e-8))


if __name__ == "__main__":
    key = jax.random.PRNGKey(0)
    kp, kt = jax.random.split(key)

    frequency_embedding_size = 256
    N = 8            # batch of timesteps (padded to 16 rows inside the wrapper)
    hidden_size = 32

    params = init_params(kp, hidden_size, frequency_embedding_size)
    t = jax.random.uniform(kt, (N,), jnp.float32, minval=0.0, maxval=1000.0)

    # --- f32 weights (numeric check against the pure-JAX reference) ---
    prep_f32 = prepare_params(params, jnp.float32, hidden_size)
    out_f32 = jax.block_until_ready(
        timestep_embedder(t, prep_f32, hidden_size, frequency_embedding_size))
    ref_f32 = reference(t, params, jnp.float32, frequency_embedding_size)
    assert out_f32.shape == (N, hidden_size) and out_f32.dtype == jnp.float32
    assert _max_rel_err(out_f32, ref_f32) < 1e-2, "f32 mismatch vs reference"

    # --- bf16 weights (the perf configuration: half the weight DMA bytes) ---
    prep_bf16 = prepare_params(params, jnp.bfloat16, hidden_size)
    out_bf16 = jax.block_until_ready(
        timestep_embedder(t, prep_bf16, hidden_size, frequency_embedding_size))
    ref_bf16 = reference(t, params, jnp.bfloat16, frequency_embedding_size)
    assert out_bf16.shape == (N, hidden_size) and out_bf16.dtype == jnp.bfloat16
    # Intended semantics: the kernel keeps bias-add / SiLU in f32 (v5e has no
    # bf16 VPU/EUP), while the reference -- like the PyTorch module -- applies
    # them in bf16.  The loose tolerance reflects that deliberate difference.
    assert _max_rel_err(out_bf16, ref_bf16) < 5e-2, "bf16 mismatch vs reference"

    # --- column-tiled path (the v7x 2-TC split of the w2 DMA), forced here so
    #     the grid/index_map path is exercised regardless of the host chip ---
    hidden_size2 = 256
    params2 = init_params(jax.random.PRNGKey(1), hidden_size2,
                          frequency_embedding_size)
    prep2 = prepare_params(params2, jnp.float32, hidden_size2)
    out2 = jax.block_until_ready(
        timestep_embedder(t, prep2, hidden_size2, frequency_embedding_size,
                          column_blocks=2))
    ref2 = reference(t, params2, jnp.float32, frequency_embedding_size)
    assert out2.shape == (N, hidden_size2)
    assert _max_rel_err(out2, ref2) < 1e-2, "tiled-path mismatch vs reference"

    print("KERNEL_OK")
</pallas_src>

<mosaic_0001>
module attributes {stable_mosaic.version = 11 : i64} {
  func.func @timestep_embedder_kernel(%arg0: i32, %arg1: memref<16x1xf32, #tpu.memory_space<vmem>>, %arg2: memref<2x256xf32, #tpu.memory_space<vmem>>, %arg3: memref<256x128xf32, #tpu.memory_space<vmem>>, %arg4: memref<1x128xf32, #tpu.memory_space<vmem>>, %arg5: memref<128x128xf32, #tpu.memory_space<vmem>>, %arg6: memref<1x128xf32, #tpu.memory_space<vmem>>, %arg7: memref<16x128xf32, #tpu.memory_space<vmem>>) attributes {dimension_semantics = [#tpu.dimension_semantics<parallel>], iteration_bounds = array<i64: 1>, scalar_prefetch = 0 : i64, scratch_operands = 0 : i64, tpu.core_type = #tpu.core_type<tc>, window_params = [{pipeline_mode = #tpu.pipeline_mode<synchronous>, transform_indices = @transform_0, window_bounds = array<i64: 16, 1>}, {pipeline_mode = #tpu.pipeline_mode<synchronous>, transform_indices = @transform_1, window_bounds = array<i64: 2, 256>}, {pipeline_mode = #tpu.pipeline_mode<synchronous>, transform_indices = @transform_2, window_bounds = array<i64: 256, 128>}, {pipeline_mode = #tpu.pipeline_mode<synchronous>, transform_indices = @transform_3, window_bounds = array<i64: 1, 128>}, {transform_indices = @transform_4, window_bounds = array<i64: 128, 128>}, {transform_indices = @transform_5, window_bounds = array<i64: 1, 128>}, {transform_indices = @transform_6, window_bounds = array<i64: 16, 128>}]} {
    %c0 = arith.constant 0 : index
    %c0_0 = arith.constant 0 : index
    %0 = vector.load %arg1[%c0, %c0_0] : memref<16x1xf32, #tpu.memory_space<vmem>>, vector<16x1xf32>
    %c0_1 = arith.constant 0 : index
    %c0_2 = arith.constant 0 : index
    %1 = vector.load %arg2[%c0_1, %c0_2] : memref<2x256xf32, #tpu.memory_space<vmem>>, vector<2x256xf32>
    %2 = vector.extract_strided_slice %1 {offsets = [0, 0], sizes = [1, 256], strides = [1, 1]} : vector<2x256xf32> to vector<1x256xf32>
    %3 = vector.broadcast %0 : vector<16x1xf32> to vector<16x256xf32>
    %4 = vector.broadcast %2 : vector<1x256xf32> to vector<16x256xf32>
    %5 = arith.mulf %3, %4 : vector<16x256xf32>
    %6 = vector.extract_strided_slice %1 {offsets = [1, 0], sizes = [1, 256], strides = [1, 1]} : vector<2x256xf32> to vector<1x256xf32>
    %7 = vector.broadcast %6 : vector<1x256xf32> to vector<16x256xf32>
    %8 = arith.addf %5, %7 : vector<16x256xf32>
    %9 = math.sin %8 : vector<16x256xf32>
    %c0_3 = arith.constant 0 : index
    %c0_4 = arith.constant 0 : index
    %10 = vector.load %arg3[%c0_3, %c0_4] : memref<256x128xf32, #tpu.memory_space<vmem>>, vector<256x128xf32>
    %cst = arith.constant dense<0.000000e+00> : vector<16x128xf32>
    %11 = tpu.matmul %9, %10, %cst {dimension_numbers = #tpu.dot_dimension_numbers<[1], [0], [0], [1], [0, 0, 1, 1], [], []>} : vector<16x256xf32>, vector<256x128xf32>, vector<16x128xf32> -> vector<16x128xf32>
    %c0_5 = arith.constant 0 : index
    %c0_6 = arith.constant 0 : index
    %12 = vector.load %arg4[%c0_5, %c0_6] : memref<1x128xf32, #tpu.memory_space<vmem>>, vector<1x128xf32>
    %13 = vector.broadcast %12 : vector<1x128xf32> to vector<16x128xf32>
    %14 = arith.addf %11, %13 : vector<16x128xf32>
    %15 = arith.negf %14 : vector<16x128xf32>
    %16 = math.exp %15 : vector<16x128xf32>
    %cst_7 = arith.constant 1.000000e+00 : f32
    %17 = vector.broadcast %cst_7 : f32 to vector<16x128xf32>
    %18 = arith.addf %17, %16 : vector<16x128xf32>
    %19 = arith.divf %17, %18 : vector<16x128xf32>
    %20 = arith.mulf %14, %19 : vector<16x128xf32>
    %c0_8 = arith.constant 0 : index
    %c0_9 = arith.constant 0 : index
    %21 = vector.load %arg5[%c0_8, %c0_9] : memref<128x128xf32, #tpu.memory_space<vmem>>, vector<128x128xf32>
    %cst_10 = arith.constant dense<0.000000e+00> : vector<16x128xf32>
    %22 = tpu.matmul %20, %21, %cst_10 {dimension_numbers = #tpu.dot_dimension_numbers<[1], [0], [0], [1], [0, 0, 1, 1], [], []>} : vector<16x128xf32>, vector<128x128xf32>, vector<16x128xf32> -> vector<16x128xf32>
    %c0_11 = arith.constant 0 : index
    %c0_12 = arith.constant 0 : index
    %23 = vector.load %arg6[%c0_11, %c0_12] : memref<1x128xf32, #tpu.memory_space<vmem>>, vector<1x128xf32>
    %24 = vector.broadcast %23 : vector<1x128xf32> to vector<16x128xf32>
    %25 = arith.addf %22, %24 : vector<16x128xf32>
    %c0_13 = arith.constant 0 : index
    %c0_14 = arith.constant 0 : index
    %26 = vector.load %arg7[%c0_13, %c0_14] : memref<16x128xf32, #tpu.memory_space<vmem>>, vector<16x128xf32>
    tpu.vector_store %arg7[%c0_13, %c0_14], %25 {strides = array<i32>} : memref<16x128xf32, #tpu.memory_space<vmem>>, vector<16x128xf32>,
    return
  }
  func.func @transform_0(%arg0: i32) -> (i32, i32) {
    %c0_i32 = arith.constant 0 : i32
    %c0_i32_0 = arith.constant 0 : i32
    %c0_i32_1 = arith.constant 0 : i32
    return %c0_i32, %c0_i32_0 : i32, i32
  }
  func.func @transform_1(%arg0: i32) -> (i32, i32) {
    %c0_i32 = arith.constant 0 : i32
    %c0_i32_0 = arith.constant 0 : i32
    %c0_i32_1 = arith.constant 0 : i32
    return %c0_i32, %c0_i32_0 : i32, i32
  }
  func.func @transform_2(%arg0: i32) -> (i32, i32) {
    %c0_i32 = arith.constant 0 : i32
    %c0_i32_0 = arith.constant 0 : i32
    %c0_i32_1 = arith.constant 0 : i32
    return %c0_i32, %c0_i32_0 : i32, i32
  }
  func.func @transform_3(%arg0: i32) -> (i32, i32) {
    %c0_i32 = arith.constant 0 : i32
    %c0_i32_0 = arith.constant 0 : i32
    %c0_i32_1 = arith.constant 0 : i32
    return %c0_i32, %c0_i32_0 : i32, i32
  }
  func.func @transform_4(%arg0: i32) -> (i32, i32) {
    %c0_i32 = arith.constant 0 : i32
    %c0_i32_0 = arith.constant 0 : i32
    return %c0_i32, %arg0 : i32, i32
  }
  func.func @transform_5(%arg0: i32) -> (i32, i32) {
    %c0_i32 = arith.constant 0 : i32
    %c0_i32_0 = arith.constant 0 : i32
    return %c0_i32, %arg0 : i32, i32
  }
  func.func @transform_6(%arg0: i32) -> (i32, i32) {
    %c0_i32 = arith.constant 0 : i32
    %c0_i32_0 = arith.constant 0 : i32
    return %c0_i32, %arg0 : i32, i32
  }
}

</mosaic_0001>

<llo_original>
// kernel: tpu_custom_call.1
$region0: #{tpu_custom_call.1}
  #allocation0 [shape = 'u32[]', space=smem, size = 0x4, offset = 0x4, fixed_abs, tag = 'smem constant byte address 0x4 - core index']
  #allocation1 [shape = 'u32[144,128]{1,0:T(1,128)}', space=vmem, size = 0x12000, scoped, tag = 'internal scratch']
  %s0 = inlined_call_operand.vmem [shape: f32[16,1], index: 0, kind: input, shape index: {}]
  %s1 = inlined_call_operand.vmem [shape: f32[2,256], index: 1, kind: input, shape index: {}]
  %s2 = inlined_call_operand.hbm [shape: f32[256,128], index: 2, kind: input, shape index: {}]
  %s3 = inlined_call_operand.vmem [shape: f32[1,128], index: 3, kind: input, shape index: {}]
  %s4 = inlined_call_operand.hbm [shape: f32[128,128], index: 4, kind: input, shape index: {}]
  %s5 = inlined_call_operand.vmem [shape: f32[1,128], index: 5, kind: input, shape index: {}]
  %s6 = inlined_call_operand.hbm [shape: f32[16,128], index: 6, kind: output, shape index: {}]
  %s7 = sld [smem:[#allocation0]]
  $region42: #{tpu_custom_call.1} parent=0
    _
  %s9 = ssub.s32 1, %s7
  %s10 = scalar_select 0, %s9, %s7
  $region1: #{tpu_custom_call.1} parent=0
    #allocation2 [shape = 'u8[131072]{0}', space=vmem, size = 0x20000, scoped, tag = 'input window, operand 2, single buffered']
    #allocation3 [shape = 's32[1]{0}', space=sflag, size = 0x4, scoped, tag = 'scoped memory for tpu_custom_call.1']
    #allocation4 [shape = 's32[1]{0}', space=sflag, size = 0x4, scoped, tag = 'scoped memory for tpu_custom_call.1']
    #allocation5 [shape = 'u8[65536]{0}', space=vmem, size = 0x10000, scoped, tag = 'input window, operand 4, single buffered']
    #allocation6 [shape = 's32[1]{0}', space=sflag, size = 0x4, scoped, tag = 'scoped memory for tpu_custom_call.1']
    #allocation7 [shape = 'u8[8192]{0}', space=vmem, size = 0x2000, scoped, tag = 'output window, operand 0, single buffered']
    %11 = vsyncpa [#allocation3], 0
    %12 = vsyncpa [#allocation6], 0
    %13 = vsyncpa [#allocation4], 0
    // Predicated region
    $region2: #{tpu_custom_call.1} parent=1 // pred_check
      _
    $region3: #{tpu_custom_call.1} parent=1 // pred_check_branch
      %15 = sbr.rel (0) target = $region5
    $region4: #{tpu_custom_call.1} parent=1 // pred_region
      _
    $region5: #{tpu_custom_call.1} parent=1 // pred_fallthru
      _
    // Predicated region
    $region6: #{tpu_custom_call.1} parent=1 // pred_check
      _
    $region7: #{tpu_custom_call.1} parent=1 // pred_check_branch
      %17 = sbr.rel (0) target = $region9
    $region8: #{tpu_custom_call.1} parent=1 // pred_region
      _
    $region9: #{tpu_custom_call.1} parent=1 // pred_fallthru
      _
    // Predicated region
    $region10: #{tpu_custom_call.1} parent=1 // pred_check
      _
    $region11: #{tpu_custom_call.1} parent=1 // pred_check_branch
      %19 = sbr.rel (0) target = $region13
    $region12: #{tpu_custom_call.1} parent=1 // pred_region
      %s21 = ssub.s32 4096, 4096
      %22 = vsyncadd [#allocation3], %s21
      %s23 = sshll.u32 [#allocation2], 4
      %s24 = int_to_ptr.vmem [resolvable:$true] %s23
      %29 = dma.hbm_to_vmem [thread:$0]  %s2, 4096, %s24, [#allocation3], 128, 128, 8
    $region13: #{tpu_custom_call.1} parent=1 // pred_fallthru
      _
    // Predicated region
    $region14: #{tpu_custom_call.1} parent=1 // pred_check
      _
    $region15: #{tpu_custom_call.1} parent=1 // pred_check_branch
      %31 = sbr.rel (0) target = $region17
    $region16: #{tpu_custom_call.1} parent=1 // pred_region
      _
    $region17: #{tpu_custom_call.1} parent=1 // pred_fallthru
      _
    // Predicated region
    $region18: #{tpu_custom_call.1} parent=1 // pred_check
      _
    $region19: #{tpu_custom_call.1} parent=1 // pred_check_branch
      %33 = sbr.rel (0) target = $region21
    $region20: #{tpu_custom_call.1} parent=1 // pred_region
      %s35 = ssub.s32 2048, 2048
      %36 = vsyncadd [#allocation6], %s35
      %s37 = sshll.u32 [#allocation5], 4
      %s38 = int_to_ptr.vmem [resolvable:$true] %s37
      %43 = dma.hbm_to_vmem [thread:$0]  %s4, 2048, %s38, [#allocation6], 128, 128, 8
    $region21: #{tpu_custom_call.1} parent=1 // pred_fallthru
      _
    // Predicated region
    $region22: #{tpu_custom_call.1} parent=1 // pred_check
      _
    $region23: #{tpu_custom_call.1} parent=1 // pred_check_branch
      %45 = sbr.rel (0) target = $region25
    $region24: #{tpu_custom_call.1} parent=1 // pred_region
      _
    $region25: #{tpu_custom_call.1} parent=1 // pred_fallthru
      _
    // Predicated region
    $region26: #{tpu_custom_call.1} parent=1 // pred_check
      _
    $region27: #{tpu_custom_call.1} parent=1 // pred_check_branch
      %47 = sbr.rel (0) target = $region29
    $region28: #{tpu_custom_call.1} parent=1 // pred_region
      %48 = dma.done [#allocation3], 4096
    $region29: #{tpu_custom_call.1} parent=1 // pred_fallthru
      _
    // Predicated region
    $region30: #{tpu_custom_call.1} parent=1 // pred_check
      _
    $region31: #{tpu_custom_call.1} parent=1 // pred_check_branch
      %50 = sbr.rel (0) target = $region33
    $region32: #{tpu_custom_call.1} parent=1 // pred_region
      %51 = dma.done [#allocation6], 2048
    $region33: #{tpu_custom_call.1} parent=1 // pred_fallthru
      _
    %v52 = vld [vmem:[%s0] sm:$0xff]
    %v53 = vld [vmem:[%s0 + $0x8] sm:$0xff]
    %v54 = vld [vmem:[%s1] sm:$0xf]
    %56 = vset.pattern.permute.xlu0 0
    %57 = vperm.xlu0 %56, %v52
    %v58 = vpop.permute.xlu0 %57
    %61 = vset.pattern.permute.xlu0 0
    %62 = vperm.xlu0 %61, %v53
    %v63 = vpop.permute.xlu0 %62
    %v66 = vlaneseq
    %v67 = vshrl.u32 %v66, 7
    %v68 = vsub.s32 0, %v67
    %v69 = vrot.slane %v54, %v68
    %v70 = vlaneseq
    %v71 = vshrl.u32 %v70, 7
    %v72 = vsub.s32 2, %v71
    %v73 = vrot.slane %v54, %v72
    %v76 = vlaneseq
    %v77 = vshrl.u32 %v76, 7
    %v78 = vsub.s32 0, %v77
    %v79 = vrot.slane %v69, %v78
    %v80 = vlaneseq
    %v81 = vshrl.u32 %v80, 7
    %v82 = vsub.s32 0, %v81
    %v83 = vrot.slane %v73, %v82
    %v84 = vmul.f32 %v58, %v79
    %v85 = vmul.f32 %v58, %v83
    %v86 = vmul.f32 %v63, %v79
    %v87 = vmul.f32 %v63, %v83
    %v88 = vlaneseq
    %v89 = vshrl.u32 %v88, 7
    %v90 = vsub.s32 1, %v89
    %v91 = vrot.slane %v54, %v90
    %v92 = vlaneseq
    %v93 = vshrl.u32 %v92, 7
    %v94 = vsub.s32 3, %v93
    %v95 = vrot.slane %v54, %v94
    %v98 = vlaneseq
    %v99 = vshrl.u32 %v98, 7
    %v100 = vsub.s32 1, %v99
    %v101 = vrot.slane %v91, %v100
    %v102 = vlaneseq
    %v103 = vshrl.u32 %v102, 7
    %v104 = vsub.s32 1, %v103
    %v105 = vrot.slane %v95, %v104
    %v106 = vadd.f32 %v84, %v101
    %v107 = vadd.f32 %v85, %v105
    %v108 = vadd.f32 %v86, %v101
    %v109 = vadd.f32 %v87, %v105
    %v110 = vand.u32 2147483647, %v106
    %vm111 = vcmp.le.f32.partialorder %v110, 0.7853982
    %vm112 = vcmp.lt.s32.totalorder %v106, 0
    %v113 = vand.u32 %v106, 2139095040
    %v114 = vshrl.u32 %v113, 23
    %v115 = vsub.s32 %v114, 127
    %v116 = vand.u32 2147483647, %v106
    %v117 = vand.u32 %v116, 8388607
    %v118 = vor.u32 %v117, 8388608
    %v119 = vsub.s32 0, %v118
    %v120 = vadd.s32 %v115, 1
    %vm121 = vcmp.gt.s32.totalorder %v120, 0
    %v122 = vsel %vm121, %v120, 0
    %v123 = vshrl.u32 %v122, 5
    %v124 = vand.u32 %v122, 31
    %v125 = vsub.s32 32, %v124
    %v126 = vshrl.u32 683565275, %v125
    %v127 = vshll.u32 683565275, %v124
    %v128 = vshrl.u32 2475754826, %v125
    %v129 = vor.u32 %v127, %v128
    %v130 = vshll.u32 2475754826, %v124
    %v131 = vshrl.u32 2131351028, %v125
    %v132 = vor.u32 %v130, %v131
    %v133 = vshll.u32 2131351028, %v124
    %v134 = vshrl.u32 2102212464, %v125
    %v135 = vor.u32 %v133, %v134
    %v136 = vshll.u32 2102212464, %v124
    %v137 = vshrl.u32 920167782, %v125
    %v138 = vor.u32 %v136, %v137
    %v139 = vshll.u32 920167782, %v124
    %v140 = vshrl.u32 1326507024, %v125
    %v141 = vor.u32 %v139, %v140
    %vm142 = vcmp.lt.s32.totalorder %v123, 1
    %vm143 = vcmp.lt.s32.totalorder %v123, 2
    %vm144 = vcmp.lt.s32.totalorder %v123, 3
    %vm145 = vcmp.lt.s32.totalorder %v123, 4
    %v146 = vsel %vm142, %v126, %v129
    %v147 = vsel %vm145, %v135, 2102212464
    %v148 = vsel %vm144, %v132, %v147
    %v149 = vsel %vm143, %v146, %v148
    %v150 = vsel %vm142, %v129, %v132
    %v151 = vsel %vm145, %v138, 920167782
    %v152 = vsel %vm144, %v135, %v151
    %v153 = vsel %vm143, %v150, %v152
    %v154 = vsel %vm142, %v132, %v135
    %v155 = vsel %vm145, %v141, 1326507024
    %v156 = vsel %vm144, %v138, %v155
    %v157 = vsel %vm143, %v154, %v156
    %v158 = vshll.u32 %v118, 8
    %v159 = vmul.u32.u64.compose %v158, %v157
    %v160 = vextract.low.u32 %v159
    %v161 = vextract.high.u32 %v159
    %v162 = vmul.u32.u64.compose %v158, %v153
    %v163 = vextract.low.u32 %v162
    %v164 = vextract.high.u32 %v162
    %v165 = vmul.u32 %v158, %v149
    %v166 = vadd.s32 %v161, %v163
    %vm167 = vc.u32 %v161, %v163
    %v168 = vadd.s32 %v164, 1
    %v169 = vsel %vm167, %v168, %v164
    %v170 = vadd.s32 %v165, %v169
    %v171 = vadd.s32 %v170, 536870912
    %v172 = vshrl.u32 %v171, 30
    %v173 = vshll.u32 %v172, 30
    %v174 = vsub.s32 %v170, %v173
    %vm175 = vcmp.lt.s32.totalorder %v174, 0
    %v176 = vsub.s32 0, %v174
    %v177 = vsel %vm175, %v176, %v174
    %v178 = vclz %v177
    %v179 = vsub.s32 %v178, 2
    %vm180 = vcmp.gt.s32.totalorder 0, %v179
    %v181 = vsel %vm180, 0, %v179
    %v182 = vsub.s32 32, %v181
    %v183 = vshll.u32 %v174, %v181
    %v184 = vshrl.u32 %v166, %v182
    %v185 = vor.u32 %v183, %v184
    %v186 = vsub.s32 4294967266, %v181
    %v187 = vadd.s32 %v186, 127
    %v188 = vshll.u32 %v187, 23
    %v189 = vor.u32 4788187, %v188
    %v190 = vand.u32 2147483647, %v189
    %v192 = vcvt.s32.f32 %v185
    %v193 = vmul.f32 %v192, %v190
    %v194 = vxor.u32 %v193, 2147483648
    %v195 = vsel %vm112, %v194, %v193
    %v196 = vsub.s32 4, %v172
    %v197 = vsel %vm112, %v196, %v172
    %v198 = vsel %vm111, %v106, %v195
    %v199 = vsel %vm111, 0, %v197
    %v200 = vcosq.f32.pop %v198
    %v201 = vsinq.f32.pop %v198
    %vm202 = vweird.f32 %v106
    %v203 = vadd.s32 %v199, 3
    %v204 = vand.u32 %v203, 3
    %vm205 = vcmp.lt.s32.totalorder %v204, 2
    %vm206 = vcmp.eq.s32.totalorder %v204, 0
    %v207 = vxor.u32 %v201, 2147483648
    %v208 = vsel %vm206, %v200, %v207
    %vm209 = vcmp.eq.s32.totalorder %v204, 2
    %v210 = vxor.u32 %v200, 2147483648
    %v211 = vsel %vm209, %v210, %v201
    %v212 = vsel %vm205, %v208, %v211
    %v213 = vsel %vm202, nan, %v212
    %v214 = vand.u32 2147483647, %v107
    %vm215 = vcmp.le.f32.partialorder %v214, 0.7853982
    %vm216 = vcmp.lt.s32.totalorder %v107, 0
    %v217 = vand.u32 %v107, 2139095040
    %v218 = vshrl.u32 %v217, 23
    %v219 = vsub.s32 %v218, 127
    %v220 = vand.u32 2147483647, %v107
    %v221 = vand.u32 %v220, 8388607
    %v222 = vor.u32 %v221, 8388608
    %v223 = vsub.s32 0, %v222
    %v224 = vadd.s32 %v219, 1
    %vm225 = vcmp.gt.s32.totalorder %v224, 0
    %v226 = vsel %vm225, %v224, 0
    %v227 = vshrl.u32 %v226, 5
    %v228 = vand.u32 %v226, 31
    %v229 = vsub.s32 32, %v228
    %v230 = vshrl.u32 683565275, %v229
    %v231 = vshll.u32 683565275, %v228
    %v232 = vshrl.u32 2475754826, %v229
    %v233 = vor.u32 %v231, %v232
    %v234 = vshll.u32 2475754826, %v228
    %v235 = vshrl.u32 2131351028, %v229
    %v236 = vor.u32 %v234, %v235
    %v237 = vshll.u32 2131351028, %v228
    %v238 = vshrl.u32 2102212464, %v229
    %v239 = vor.u32 %v237, %v238
    %v240 = vshll.u32 2102212464, %v228
    %v241 = vshrl.u32 920167782, %v229
    %v242 = vor.u32 %v240, %v241
    %v243 = vshll.u32 920167782, %v228
    %v244 = vshrl.u32 1326507024, %v229
    %v245 = vor.u32 %v243, %v244
    %vm246 = vcmp.lt.s32.totalorder %v227, 1
    %vm247 = vcmp.lt.s32.totalorder %v227, 2
    %vm248 = vcmp.lt.s32.totalorder %v227, 3
    %vm249 = vcmp.lt.s32.totalorder %v227, 4
    %v250 = vsel %vm246, %v230, %v233
    %v251 = vsel %vm249, %v239, 2102212464
    %v252 = vsel %vm248, %v236, %v251
    %v253 = vsel %vm247, %v250, %v252
    %v254 = vsel %vm246, %v233, %v236
    %v255 = vsel %vm249, %v242, 920167782
    %v256 = vsel %vm248, %v239, %v255
    %v257 = vsel %vm247, %v254, %v256
    %v258 = vsel %vm246, %v236, %v239
    %v259 = vsel %vm249, %v245, 1326507024
    %v260 = vsel %vm248, %v242, %v259
    %v261 = vsel %vm247, %v258, %v260
    %v262 = vshll.u32 %v222, 8
    %v263 = vmul.u32.u64.compose %v262, %v261
    %v264 = vextract.low.u32 %v263
    %v265 = vextract.high.u32 %v263
    %v266 = vmul.u32.u64.compose %v262, %v257
    %v267 = vextract.low.u32 %v266
    %v268 = vextract.high.u32 %v266
    %v269 = vmul.u32 %v262, %v253
    %v270 = vadd.s32 %v265, %v267
    %vm271 = vc.u32 %v265, %v267
    %v272 = vadd.s32 %v268, 1
    %v273 = vsel %vm271, %v272, %v268
    %v274 = vadd.s32 %v269, %v273
    %v275 = vadd.s32 %v274, 536870912
    %v276 = vshrl.u32 %v275, 30
    %v277 = vshll.u32 %v276, 30
    %v278 = vsub.s32 %v274, %v277
    %vm279 = vcmp.lt.s32.totalorder %v278, 0
    %v280 = vsub.s32 0, %v278
    %v281 = vsel %vm279, %v280, %v278
    %v282 = vclz %v281
    %v283 = vsub.s32 %v282, 2
    %vm284 = vcmp.gt.s32.totalorder 0, %v283
    %v285 = vsel %vm284, 0, %v283
    %v286 = vsub.s32 32, %v285
    %v287 = vshll.u32 %v278, %v285
    %v288 = vshrl.u32 %v270, %v286
    %v289 = vor.u32 %v287, %v288
    %v290 = vsub.s32 4294967266, %v285
    %v291 = vadd.s32 %v290, 127
    %v292 = vshll.u32 %v291, 23
    %v293 = vor.u32 4788187, %v292
    %v294 = vand.u32 2147483647, %v293
    %v296 = vcvt.s32.f32 %v289
    %v297 = vmul.f32 %v296, %v294
    %v298 = vxor.u32 %v297, 2147483648
    %v299 = vsel %vm216, %v298, %v297
    %v300 = vsub.s32 4, %v276
    %v301 = vsel %vm216, %v300, %v276
    %v302 = vsel %vm215, %v107, %v299
    %v303 = vsel %vm215, 0, %v301
    %v304 = vcosq.f32.pop %v302
    %v305 = vsinq.f32.pop %v302
    %vm306 = vweird.f32 %v107
    %v307 = vadd.s32 %v303, 3
    %v308 = vand.u32 %v307, 3
    %vm309 = vcmp.lt.s32.totalorder %v308, 2
    %vm310 = vcmp.eq.s32.totalorder %v308, 0
    %v311 = vxor.u32 %v305, 2147483648
    %v312 = vsel %vm310, %v304, %v311
    %vm313 = vcmp.eq.s32.totalorder %v308, 2
    %v314 = vxor.u32 %v304, 2147483648
    %v315 = vsel %vm313, %v314, %v305
    %v316 = vsel %vm309, %v312, %v315
    %v317 = vsel %vm306, nan, %v316
    %v318 = vand.u32 2147483647, %v108
    %vm319 = vcmp.le.f32.partialorder %v318, 0.7853982
    %vm320 = vcmp.lt.s32.totalorder %v108, 0
    %v321 = vand.u32 %v108, 2139095040
    %v322 = vshrl.u32 %v321, 23
    %v323 = vsub.s32 %v322, 127
    %v324 = vand.u32 2147483647, %v108
    %v325 = vand.u32 %v324, 8388607
    %v326 = vor.u32 %v325, 8388608
    %v327 = vsub.s32 0, %v326
    %v328 = vadd.s32 %v323, 1
    %vm329 = vcmp.gt.s32.totalorder %v328, 0
    %v330 = vsel %vm329, %v328, 0
    %v331 = vshrl.u32 %v330, 5
    %v332 = vand.u32 %v330, 31
    %v333 = vsub.s32 32, %v332
    %v334 = vshrl.u32 683565275, %v333
    %v335 = vshll.u32 683565275, %v332
    %v336 = vshrl.u32 2475754826, %v333
    %v337 = vor.u32 %v335, %v336
    %v338 = vshll.u32 2475754826, %v332
    %v339 = vshrl.u32 2131351028, %v333
    %v340 = vor.u32 %v338, %v339
    %v341 = vshll.u32 2131351028, %v332
    %v342 = vshrl.u32 2102212464, %v333
    %v343 = vor.u32 %v341, %v342
    %v344 = vshll.u32 2102212464, %v332
    %v345 = vshrl.u32 920167782, %v333
    %v346 = vor.u32 %v344, %v345
    %v347 = vshll.u32 920167782, %v332
    %v348 = vshrl.u32 1326507024, %v333
    %v349 = vor.u32 %v347, %v348
    %vm350 = vcmp.lt.s32.totalorder %v331, 1
    %vm351 = vcmp.lt.s32.totalorder %v331, 2
    %vm352 = vcmp.lt.s32.totalorder %v331, 3
    %vm353 = vcmp.lt.s32.totalorder %v331, 4
    %v354 = vsel %vm350, %v334, %v337
    %v355 = vsel %vm353, %v343, 2102212464
    %v356 = vsel %vm352, %v340, %v355
    %v357 = vsel %vm351, %v354, %v356
    %v358 = vsel %vm350, %v337, %v340
    %v359 = vsel %vm353, %v346, 920167782
    %v360 = vsel %vm352, %v343, %v359
    %v361 = vsel %vm351, %v358, %v360
    %v362 = vsel %vm350, %v340, %v343
    %v363 = vsel %vm353, %v349, 1326507024
    %v364 = vsel %vm352, %v346, %v363
    %v365 = vsel %vm351, %v362, %v364
    %v366 = vshll.u32 %v326, 8
    %v367 = vmul.u32.u64.compose %v366, %v365
    %v368 = vextract.low.u32 %v367
    %v369 = vextract.high.u32 %v367
    %v370 = vmul.u32.u64.compose %v366, %v361
    %v371 = vextract.low.u32 %v370
    %v372 = vextract.high.u32 %v370
    %v373 = vmul.u32 %v366, %v357
    %v374 = vadd.s32 %v369, %v371
    %vm375 = vc.u32 %v369, %v371
    %v376 = vadd.s32 %v372, 1
    %v377 = vsel %vm375, %v376, %v372
    %v378 = vadd.s32 %v373, %v377
    %v379 = vadd.s32 %v378, 536870912
    %v380 = vshrl.u32 %v379, 30
    %v381 = vshll.u32 %v380, 30
    %v382 = vsub.s32 %v378, %v381
    %vm383 = vcmp.lt.s32.totalorder %v382, 0
    %v384 = vsub.s32 0, %v382
    %v385 = vsel %vm383, %v384, %v382
    %v386 = vclz %v385
    %v387 = vsub.s32 %v386, 2
    %vm388 = vcmp.gt.s32.totalorder 0, %v387
    %v389 = vsel %vm388, 0, %v387
    %v390 = vsub.s32 32, %v389
    %v391 = vshll.u32 %v382, %v389
    %v392 = vshrl.u32 %v374, %v390
    %v393 = vor.u32 %v391, %v392
    %v394 = vsub.s32 4294967266, %v389
    %v395 = vadd.s32 %v394, 127
    %v396 = vshll.u32 %v395, 23
    %v397 = vor.u32 4788187, %v396
    %v398 = vand.u32 2147483647, %v397
    %v400 = vcvt.s32.f32 %v393
    %v401 = vmul.f32 %v400, %v398
    %v402 = vxor.u32 %v401, 2147483648
    %v403 = vsel %vm320, %v402, %v401
    %v404 = vsub.s32 4, %v380
    %v405 = vsel %vm320, %v404, %v380
    %v406 = vsel %vm319, %v108, %v403
    %v407 = vsel %vm319, 0, %v405
    %v408 = vcosq.f32.pop %v406
    %v409 = vsinq.f32.pop %v406
    %vm410 = vweird.f32 %v108
    %v411 = vadd.s32 %v407, 3
    %v412 = vand.u32 %v411, 3
    %vm413 = vcmp.lt.s32.totalorder %v412, 2
    %vm414 = vcmp.eq.s32.totalorder %v412, 0
    %v415 = vxor.u32 %v409, 2147483648
    %v416 = vsel %vm414, %v408, %v415
    %vm417 = vcmp.eq.s32.totalorder %v412, 2
    %v418 = vxor.u32 %v408, 2147483648
    %v419 = vsel %vm417, %v418, %v409
    %v420 = vsel %vm413, %v416, %v419
    %v421 = vsel %vm410, nan, %v420
    %v422 = vand.u32 2147483647, %v109
    %vm423 = vcmp.le.f32.partialorder %v422, 0.7853982
    %vm424 = vcmp.lt.s32.totalorder %v109, 0
    %v425 = vand.u32 %v109, 2139095040
    %v426 = vshrl.u32 %v425, 23
    %v427 = vsub.s32 %v426, 127
    %v428 = vand.u32 2147483647, %v109
    %v429 = vand.u32 %v428, 8388607
    %v430 = vor.u32 %v429, 8388608
    %v431 = vsub.s32 0, %v430
    %v432 = vadd.s32 %v427, 1
    %vm433 = vcmp.gt.s32.totalorder %v432, 0
    %v434 = vsel %vm433, %v432, 0
    %v435 = vshrl.u32 %v434, 5
    %v436 = vand.u32 %v434, 31
    %v437 = vsub.s32 32, %v436
    %v438 = vshrl.u32 683565275, %v437
    %v439 = vshll.u32 683565275, %v436
    %v440 = vshrl.u32 2475754826, %v437
    %v441 = vor.u32 %v439, %v440
    %v442 = vshll.u32 2475754826, %v436
    %v443 = vshrl.u32 2131351028, %v437
    %v444 = vor.u32 %v442, %v443
    %v445 = vshll.u32 2131351028, %v436
    %v446 = vshrl.u32 2102212464, %v437
    %v447 = vor.u32 %v445, %v446
    %v448 = vshll.u32 2102212464, %v436
    %v449 = vshrl.u32 920167782, %v437
    %v450 = vor.u32 %v448, %v449
    %v451 = vshll.u32 920167782, %v436
    %v452 = vshrl.u32 1326507024, %v437
    %v453 = vor.u32 %v451, %v452
    %vm454 = vcmp.lt.s32.totalorder %v435, 1
    %vm455 = vcmp.lt.s32.totalorder %v435, 2
    %vm456 = vcmp.lt.s32.totalorder %v435, 3
    %vm457 = vcmp.lt.s32.totalorder %v435, 4
    %v458 = vsel %vm454, %v438, %v441
    %v459 = vsel %vm457, %v447, 2102212464
    %v460 = vsel %vm456, %v444, %v459
    %v461 = vsel %vm455, %v458, %v460
    %v462 = vsel %vm454, %v441, %v444
    %v463 = vsel %vm457, %v450, 920167782
    %v464 = vsel %vm456, %v447, %v463
    %v465 = vsel %vm455, %v462, %v464
    %v466 = vsel %vm454, %v444, %v447
    %v467 = vsel %vm457, %v453, 1326507024
    %v468 = vsel %vm456, %v450, %v467
    %v469 = vsel %vm455, %v466, %v468
    %v470 = vshll.u32 %v430, 8
    %v471 = vmul.u32.u64.compose %v470, %v469
    %v472 = vextract.low.u32 %v471
    %v473 = vextract.high.u32 %v471
    %v474 = vmul.u32.u64.compose %v470, %v465
    %v475 = vextract.low.u32 %v474
    %v476 = vextract.high.u32 %v474
    %v477 = vmul.u32 %v470, %v461
    %v478 = vadd.s32 %v473, %v475
    %vm479 = vc.u32 %v473, %v475
    %v480 = vadd.s32 %v476, 1
    %v481 = vsel %vm479, %v480, %v476
    %v482 = vadd.s32 %v477, %v481
    %v483 = vadd.s32 %v482, 536870912
    %v484 = vshrl.u32 %v483, 30
    %v485 = vshll.u32 %v484, 30
    %v486 = vsub.s32 %v482, %v485
    %vm487 = vcmp.lt.s32.totalorder %v486, 0
    %v488 = vsub.s32 0, %v486
    %v489 = vsel %vm487, %v488, %v486
    %v490 = vclz %v489
    %v491 = vsub.s32 %v490, 2
    %vm492 = vcmp.gt.s32.totalorder 0, %v491
    %v493 = vsel %vm492, 0, %v491
    %v494 = vsub.s32 32, %v493
    %v495 = vshll.u32 %v486, %v493
    %v496 = vshrl.u32 %v478, %v494
    %v497 = vor.u32 %v495, %v496
    %v498 = vsub.s32 4294967266, %v493
    %v499 = vadd.s32 %v498, 127
    %v500 = vshll.u32 %v499, 23
    %v501 = vor.u32 4788187, %v500
    %v502 = vand.u32 2147483647, %v501
    %v504 = vcvt.s32.f32 %v497
    %v505 = vmul.f32 %v504, %v502
    %v506 = vxor.u32 %v505, 2147483648
    %v507 = vsel %vm424, %v506, %v505
    %v508 = vsub.s32 4, %v484
    %v509 = vsel %vm424, %v508, %v484
    %v510 = vsel %vm423, %v109, %v507
    %v511 = vsel %vm423, 0, %v509
    %v512 = vcosq.f32.pop %v510
    %v513 = vsinq.f32.pop %v510
    %vm514 = vweird.f32 %v109
    %v515 = vadd.s32 %v511, 3
    %v516 = vand.u32 %v515, 3
    %vm517 = vcmp.lt.s32.totalorder %v516, 2
    %vm518 = vcmp.eq.s32.totalorder %v516, 0
    %v519 = vxor.u32 %v513, 2147483648
    %v520 = vsel %vm518, %v512, %v519
    %vm521 = vcmp.eq.s32.totalorder %v516, 2
    %v522 = vxor.u32 %v512, 2147483648
    %v523 = vsel %vm521, %v522, %v513
    %v524 = vsel %vm517, %v520, %v523
    %v525 = vsel %vm514, nan, %v524
    %v526 = vld [vmem:[#allocation2] sm:$0xff]
    %v527 = vld [vmem:[#allocation2 + $0x8] sm:$0xff]
    %v528 = vld [vmem:[#allocation2 + $0x10] sm:$0xff]
    %v529 = vld [vmem:[#allocation2 + $0x18] sm:$0xff]
    %v530 = vld [vmem:[#allocation2 + $0x20] sm:$0xff]
    %v531 = vld [vmem:[#allocation2 + $0x28] sm:$0xff]
    %v532 = vld [vmem:[#allocation2 + $0x30] sm:$0xff]
    %v533 = vld [vmem:[#allocation2 + $0x38] sm:$0xff]
    %v534 = vld [vmem:[#allocation2 + $0x40] sm:$0xff]
    %v535 = vld [vmem:[#allocation2 + $0x48] sm:$0xff]
    %v536 = vld [vmem:[#allocation2 + $0x50] sm:$0xff]
    %v537 = vld [vmem:[#allocation2 + $0x58] sm:$0xff]
    %v538 = vld [vmem:[#allocation2 + $0x60] sm:$0xff]
    %v539 = vld [vmem:[#allocation2 + $0x68] sm:$0xff]
    %v540 = vld [vmem:[#allocation2 + $0x70] sm:$0xff]
    %v541 = vld [vmem:[#allocation2 + $0x78] sm:$0xff]
    %v542 = vld [vmem:[#allocation2 + $0x80] sm:$0xff]
    %v543 = vld [vmem:[#allocation2 + $0x88] sm:$0xff]
    %v544 = vld [vmem:[#allocation2 + $0x90] sm:$0xff]
    %v545 = vld [vmem:[#allocation2 + $0x98] sm:$0xff]
    %v546 = vld [vmem:[#allocation2 + $0xa0] sm:$0xff]
    %v547 = vld [vmem:[#allocation2 + $0xa8] sm:$0xff]
    %v548 = vld [vmem:[#allocation2 + $0xb0] sm:$0xff]
    %v549 = vld [vmem:[#allocation2 + $0xb8] sm:$0xff]
    %v550 = vld [vmem:[#allocation2 + $0xc0] sm:$0xff]
    %v551 = vld [vmem:[#allocation2 + $0xc8] sm:$0xff]
    %v552 = vld [vmem:[#allocation2 + $0xd0] sm:$0xff]
    %v553 = vld [vmem:[#allocation2 + $0xd8] sm:$0xff]
    %v554 = vld [vmem:[#allocation2 + $0xe0] sm:$0xff]
    %v555 = vld [vmem:[#allocation2 + $0xe8] sm:$0xff]
    %v556 = vld [vmem:[#allocation2 + $0xf0] sm:$0xff]
    %v557 = vld [vmem:[#allocation2 + $0xf8] sm:$0xff]
    %v558 = vld [vmem:[%s3] sm:$0x1]
    %v560 = vlaneseq
    %v561 = vshrl.u32 %v560, 7
    %v562 = vsub.s32 0, %v561
    %v563 = vrot.slane %v558, %v562
    %565 = vmatprep.subr.mxu0 0.0
    %566 = vmatpush1.msra.mxu0 %v526
    %567 = vmatprep.subr.mxu0 0.0
    %568 = vmatpush1.msra.mxu0 %v527
    %569 = vmatprep.subr.mxu0 0.0
    %570 = vmatpush1.msra.mxu0 %v528
    %571 = vmatprep.subr.mxu0 0.0
    %572 = vmatpush1.msra.mxu0 %v529
    %573 = vmatprep.subr.mxu0 0.0
    %574 = vmatpush1.msra.mxu0 %v530
    %575 = vmatprep.subr.mxu0 0.0
    %576 = vmatpush1.msra.mxu0 %v531
    %577 = vmatprep.subr.mxu0 0.0
    %578 = vmatpush1.msra.mxu0 %v532
    %579 = vmatprep.subr.mxu0 0.0
    %580 = vmatpush1.msra.mxu0 %v533
    %581 = vmatprep.subr.mxu0 0.0
    %582 = vmatpush1.msra.mxu0 %v534
    %583 = vmatprep.subr.mxu0 0.0
    %584 = vmatpush1.msra.mxu0 %v535
    %585 = vmatprep.subr.mxu0 0.0
    %586 = vmatpush1.msra.mxu0 %v536
    %587 = vmatprep.subr.mxu0 0.0
    %588 = vmatpush1.msra.mxu0 %v537
    %589 = vmatprep.subr.mxu0 0.0
    %590 = vmatpush1.msra.mxu0 %v538
    %591 = vmatprep.subr.mxu0 0.0
    %592 = vmatpush1.msra.mxu0 %v539
    %593 = vmatprep.subr.mxu0 0.0
    %594 = vmatpush1.msra.mxu0 %v540
    %595 = vmatprep.subr.mxu0 0.0
    %596 = vmatpush1.msra.mxu0 %v541
    %597 = vmatprep.subr.mxu0 0.0
    %598 = vmatpush1.msra.mxu0 %v542
    %599 = vmatprep.subr.mxu0 0.0
    %600 = vmatpush1.msra.mxu0 %v543
    %601 = vmatprep.subr.mxu0 0.0
    %602 = vmatpush1.msra.mxu0 %v544
    %603 = vmatprep.subr.mxu0 0.0
    %604 = vmatpush1.msra.mxu0 %v545
    %605 = vmatprep.subr.mxu0 0.0
    %606 = vmatpush1.msra.mxu0 %v546
    %607 = vmatprep.subr.mxu0 0.0
    %608 = vmatpush1.msra.mxu0 %v547
    %609 = vmatprep.subr.mxu0 0.0
    %610 = vmatpush1.msra.mxu0 %v548
    %611 = vmatprep.subr.mxu0 0.0
    %612 = vmatpush1.msra.mxu0 %v549
    %613 = vmatprep.subr.mxu0 0.0
    %614 = vmatpush1.msra.mxu0 %v550
    %615 = vmatprep.subr.mxu0 0.0
    %616 = vmatpush1.msra.mxu0 %v551
    %617 = vmatprep.subr.mxu0 0.0
    %618 = vmatpush1.msra.mxu0 %v552
    %619 = vmatprep.subr.mxu0 0.0
    %620 = vmatpush1.msra.mxu0 %v553
    %621 = vmatprep.subr.mxu0 0.0
    %622 = vmatpush1.msra.mxu0 %v554
    %623 = vmatprep.subr.mxu0 0.0
    %624 = vmatpush1.msra.mxu0 %v555
    %625 = vmatprep.subr.mxu0 0.0
    %626 = vmatpush1.msra.mxu0 %v556
    %627 = vmatprep.subr.mxu0 0.0
    %628 = vmatpush1.msra.mxu0 %v557
    %629 = vmatprep.mubr.f32.mxu0 %v317
    %630 = vmatmul.mubr.f32.gmra.mrb[0].mxu0 %v213
    %v631 = vpop.f32.mrb[0].mxu0
    %v632 = vadd.f32 %v563, %v631
    %v633 = vpop.f32.mrb[0].mxu0
    %634 = vmatprep.mubr.f32.mxu0 %v525
    %635 = vmatmul.mubr.f32.gmra.mrb[0].mxu0 %v421
    %v636 = vpop.f32.mrb[0].mxu0
    %v637 = vadd.f32 %v563, %v636
    %v638 = vpop.f32.mrb[0].mxu0
    %639 = vdwg.mxu0
    %v640 = vxor.u32 %v632, 2147483648
    %v641 = vxor.u32 %v637, 2147483648
    %v642 = vmul.f32 %v640, 1.442695
    %v643 = vpow.pop %v642
    %v644 = vmul.f32 %v641, 1.442695
    %v645 = vpow.pop %v644
    %v646 = vadd.f32 %v643, 1.0
    %v647 = vadd.f32 %v645, 1.0
    %v648 = vrcp.pop %v646
    %v649 = vmul.f32 1.0, %v648
    %v650 = vrcp.pop %v647
    %v651 = vmul.f32 1.0, %v650
    %v652 = vmul.f32 %v632, %v649
    %v653 = vmul.f32 %v637, %v651
    %v654 = vld [vmem:[#allocation5] sm:$0xff]
    %v655 = vld [vmem:[#allocation5 + $0x8] sm:$0xff]
    %v656 = vld [vmem:[#allocation5 + $0x10] sm:$0xff]
    %v657 = vld [vmem:[#allocation5 + $0x18] sm:$0xff]
    %v658 = vld [vmem:[#allocation5 + $0x20] sm:$0xff]
    %v659 = vld [vmem:[#allocation5 + $0x28] sm:$0xff]
    %v660 = vld [vmem:[#allocation5 + $0x30] sm:$0xff]
    %v661 = vld [vmem:[#allocation5 + $0x38] sm:$0xff]
    %v662 = vld [vmem:[#allocation5 + $0x40] sm:$0xff]
    %v663 = vld [vmem:[#allocation5 + $0x48] sm:$0xff]
    %v664 = vld [vmem:[#allocation5 + $0x50] sm:$0xff]
    %v665 = vld [vmem:[#allocation5 + $0x58] sm:$0xff]
    %v666 = vld [vmem:[#allocation5 + $0x60] sm:$0xff]
    %v667 = vld [vmem:[#allocation5 + $0x68] sm:$0xff]
    %v668 = vld [vmem:[#allocation5 + $0x70] sm:$0xff]
    %v669 = vld [vmem:[#allocation5 + $0x78] sm:$0xff]
    %v670 = vld [vmem:[%s5] sm:$0x1]
    %v672 = vlaneseq
    %v673 = vshrl.u32 %v672, 7
    %v674 = vsub.s32 0, %v673
    %v675 = vrot.slane %v670, %v674
    %677 = vmatprep.subr.mxu0 0.0
    %678 = vmatpush1.msra.mxu0 %v654
    %679 = vmatprep.subr.mxu0 0.0
    %680 = vmatpush1.msra.mxu0 %v655
    %681 = vmatprep.subr.mxu0 0.0
    %682 = vmatpush1.msra.mxu0 %v656
    %683 = vmatprep.subr.mxu0 0.0
    %684 = vmatpush1.msra.mxu0 %v657
    %685 = vmatprep.subr.mxu0 0.0
    %686 = vmatpush1.msra.mxu0 %v658
    %687 = vmatprep.subr.mxu0 0.0
    %688 = vmatpush1.msra.mxu0 %v659
    %689 = vmatprep.subr.mxu0 0.0
    %690 = vmatpush1.msra.mxu0 %v660
    %691 = vmatprep.subr.mxu0 0.0
    %692 = vmatpush1.msra.mxu0 %v661
    %693 = vmatprep.subr.mxu0 0.0
    %694 = vmatpush1.msra.mxu0 %v662
    %695 = vmatprep.subr.mxu0 0.0
    %696 = vmatpush1.msra.mxu0 %v663
    %697 = vmatprep.subr.mxu0 0.0
    %698 = vmatpush1.msra.mxu0 %v664
    %699 = vmatprep.subr.mxu0 0.0
    %700 = vmatpush1.msra.mxu0 %v665
    %701 = vmatprep.subr.mxu0 0.0
    %702 = vmatpush1.msra.mxu0 %v666
    %703 = vmatprep.subr.mxu0 0.0
    %704 = vmatpush1.msra.mxu0 %v667
    %705 = vmatprep.subr.mxu0 0.0
    %706 = vmatpush1.msra.mxu0 %v668
    %707 = vmatprep.subr.mxu0 0.0
    %708 = vmatpush1.msra.mxu0 %v669
    %709 = vmatprep.subr.mxu0 0.0
    %710 = vmatpush1.msra.mxu0 0.0
    %711 = vmatprep.subr.mxu0 0.0
    %712 = vmatpush1.msra.mxu0 0.0
    %713 = vmatprep.subr.mxu0 0.0
    %714 = vmatpush1.msra.mxu0 0.0
    %715 = vmatprep.subr.mxu0 0.0
    %716 = vmatpush1.msra.mxu0 0.0
    %717 = vmatprep.subr.mxu0 0.0
    %718 = vmatpush1.msra.mxu0 0.0
    %719 = vmatprep.subr.mxu0 0.0
    %720 = vmatpush1.msra.mxu0 0.0
    %721 = vmatprep.subr.mxu0 0.0
    %722 = vmatpush1.msra.mxu0 0.0
    %723 = vmatprep.subr.mxu0 0.0
    %724 = vmatpush1.msra.mxu0 0.0
    %725 = vmatprep.subr.mxu0 0.0
    %726 = vmatpush1.msra.mxu0 0.0
    %727 = vmatprep.subr.mxu0 0.0
    %728 = vmatpush1.msra.mxu0 0.0
    %729 = vmatprep.subr.mxu0 0.0
    %730 = vmatpush1.msra.mxu0 0.0
    %731 = vmatprep.subr.mxu0 0.0
    %732 = vmatpush1.msra.mxu0 0.0
    %733 = vmatprep.subr.mxu0 0.0
    %734 = vmatpush1.msra.mxu0 0.0
    %735 = vmatprep.subr.mxu0 0.0
    %736 = vmatpush1.msra.mxu0 0.0
    %737 = vmatprep.subr.mxu0 0.0
    %738 = vmatpush1.msra.mxu0 0.0
    %739 = vmatprep.subr.mxu0 0.0
    %740 = vmatpush1.msra.mxu0 0.0
    %741 = vmatprep.mubr.f32.mxu0 0.0
    %742 = vmatmul.mubr.f32.gmra.mrb[0].mxu0 %v652
    %v743 = vpop.f32.mrb[0].mxu0
    %v744 = vadd.f32 %v675, %v743
    %v745 = vpop.f32.mrb[0].mxu0
    %746 = vmatprep.mubr.f32.mxu0 0.0
    %747 = vmatmul.mubr.f32.gmra.mrb[0].mxu0 %v653
    %v748 = vpop.f32.mrb[0].mxu0
    %v749 = vadd.f32 %v675, %v748
    %v750 = vpop.f32.mrb[0].mxu0
    %751 = vdwg.mxu0
    %752 = vst [vmem:[#allocation7] sm:$0xff] %v744
    %753 = vst [vmem:[#allocation7 + $0x8] sm:$0xff] %v749
    // Predicated region
    $region34: #{tpu_custom_call.1} parent=1 // pred_check
      _
    $region35: #{tpu_custom_call.1} parent=1 // pred_check_branch
      %755 = sbr.rel (0) target = $region37
    $region36: #{tpu_custom_call.1} parent=1 // pred_region
      %s757 = ssub.s32 256, 256
      %758 = vsyncadd [#allocation4], %s757
      %s759 = sshll.u32 [#allocation7], 4
      %s760 = int_to_ptr.vmem [resolvable:$true] %s759
      %765 = dma.vmem_to_hbm [thread:$0]  %s760, 256, %s6, [#allocation4], 128, 128, 8
    $region37: #{tpu_custom_call.1} parent=1 // pred_fallthru
      _
    // Predicated region
    $region38: #{tpu_custom_call.1} parent=1 // pred_check
      _
    $region39: #{tpu_custom_call.1} parent=1 // pred_check_branch
      %767 = sbr.rel (0) target = $region41
    $region40: #{tpu_custom_call.1} parent=1 // pred_region
      %768 = dma.done [#allocation4], 256
    $region41: #{tpu_custom_call.1} parent=1 // pred_fallthru
      _
    %769 = vsyncpa [#allocation3], 1
    %770 = vsyncpa [#allocation6], 1
    %771 = vsyncpa [#allocation4], 1

</llo_original>
